<compile_context>
chip_gen: v6e
topology: v6e:2x2x1
jax: 0.10.0
libtpu: 0.0.40
codegen_flags: <defaults>
</compile_context>

<pallas_src>
import jax
import jax.numpy as jnp
from jax.experimental import pallas as pl
from jax.experimental.pallas import tpu as pltpu


def _normalize_kernel(scale_ref, bias_ref, img_ref, out_ref):
    # Pure streaming elementwise op: x * (1/std) + (-mean/std).
    # scale/bias are (block_rows, 1) and broadcast across the 128-lane axis.
    out_ref[...] = img_ref[...] * scale_ref[...] + bias_ref[...]


def _choose_blocks(rows, cols, target_bytes):
    """Pick a (block_rows, block_cols) tile that is layout-legal on TPU:
    last dim a multiple of 128 (or the full dim), second-last a multiple of 8
    (or the full dim), sized around `target_bytes` so per-step DMAs are O(MiB).
    Budget: ~2 MiB/block * 2 arrays * 2 pipeline buffers fits comfortably in
    the 32 MiB scoped VMEM limit (also safe on v7x's 64 MiB physical VMEM)."""
    elem = 4  # f32
    # Columns: keep full width if 8 sublane-rows of it fit the budget,
    # otherwise the largest multiple of 128 that does.
    if cols <= 128 or 8 * cols * elem <= target_bytes:
        bc = cols
    else:
        bc = max(128, (target_bytes // (8 * elem)) // 128 * 128)
        bc = min(bc, (cols // 128) * 128)
    # Rows: as many as fit the budget; multiple of 8 unless we take all rows.
    want = max(1, target_bytes // (bc * elem))
    if rows <= want:
        br = rows
    elif want >= 8:
        br = (want // 8) * 8
    else:
        br = 8
    return br, bc


def normalize(image, mean, std, *, target_block_bytes=2 * 1024 * 1024):
    """image: [N, C, H, W]; mean, std: [C]. Returns (image - mean) / std in f32."""
    N, C, H, W = image.shape
    image = image.astype(jnp.float32)  # handles uint8 inputs like torch would
    mean = jnp.asarray(mean, jnp.float32).reshape(C)
    std = jnp.asarray(std, jnp.float32).reshape(C)

    # Hoist the per-element divide out of the kernel: out = x * scale + bias.
    scale = 1.0 / std
    bias = -mean * scale

    R, L = N * C, H * W
    img2d = image.reshape(R, L)                  # lane-dense 2D view
    scale2d = jnp.tile(scale, N).reshape(R, 1)   # row r -> channel r % C
    bias2d = jnp.tile(bias, N).reshape(R, 1)

    br, bc = _choose_blocks(R, L, target_block_bytes)
    grid = (pl.cdiv(R, br), pl.cdiv(L, bc))

    out2d = pl.pallas_call(
        _normalize_kernel,
        out_shape=jax.ShapeDtypeStruct((R, L), jnp.float32),
        grid=grid,
        in_specs=[
            pl.BlockSpec((br, 1), lambda i, j: (i, 0)),    # scale rows
            pl.BlockSpec((br, 1), lambda i, j: (i, 0)),    # bias rows
            pl.BlockSpec((br, bc), lambda i, j: (i, j)),   # image tile
        ],
        out_specs=pl.BlockSpec((br, bc), lambda i, j: (i, j)),
        # Normalize in place when the image buffer is donated; XLA inserts a
        # copy when it is not, so this is always semantically safe.
        input_output_aliases={2: 0},
        compiler_params=pltpu.CompilerParams(
            dimension_semantics=("parallel", "parallel"),
            vmem_limit_bytes=32 * 1024 * 1024,
        ),
    )(scale2d, bias2d, img2d)

    return out2d.reshape(N, C, H, W)


class Normalize:
    """Pallas equivalent of the PyTorch Normalize module (operates on batch dict)."""

    def __init__(self, mean, std):
        self.mean = jnp.asarray(mean, jnp.float32)
        self.std = jnp.asarray(std, jnp.float32)

    def __call__(self, batch):
        # Device placement (`.to(device)` in the PyTorch module) is implicit in JAX.
        batch["image"] = normalize(batch["image"], self.mean, self.std)
        return batch


if __name__ == "__main__":
    key = jax.random.PRNGKey(0)
    N, C, H, W = 2, 4, 16, 16
    image = jax.random.uniform(key, (N, C, H, W), dtype=jnp.float32) * 255.0

    # Deterministic per-channel statistics (ImageNet-style values).
    mean = jnp.array([123.675, 116.28, 103.53, 110.0], dtype=jnp.float32)
    std = jnp.array([58.395, 57.12, 57.375, 60.0], dtype=jnp.float32)

    # Reference computed BEFORE the kernel call (kernel may alias its input).
    ref = (image - mean.reshape(1, C, 1, 1)) / std.reshape(1, C, 1, 1)
    ref = jax.block_until_ready(ref)

    module = Normalize(mean, std)
    batch = {"image": image}
    out = module(batch)["image"]
    out = jax.block_until_ready(out)

    assert out.shape == (N, C, H, W)
    assert out.dtype == jnp.float32
    assert jnp.allclose(out, ref, atol=1e-5, rtol=1e-5)

    print("KERNEL_OK")
</pallas_src>

<mosaic_0001>
module attributes {stable_mosaic.version = 11 : i64} {
  func.func @_normalize_kernel(%arg0: i32, %arg1: i32, %arg2: memref<8x1xf32, #tpu.memory_space<vmem>>, %arg3: memref<8x1xf32, #tpu.memory_space<vmem>>, %arg4: memref<8x256xf32, #tpu.memory_space<vmem>>, %arg5: memref<8x256xf32, #tpu.memory_space<vmem>>) attributes {dimension_semantics = [#tpu.dimension_semantics<parallel>, #tpu.dimension_semantics<parallel>], iteration_bounds = array<i64: 1, 1>, scalar_prefetch = 0 : i64, scratch_operands = 0 : i64, tpu.core_type = #tpu.core_type<tc>, window_params = [{transform_indices = @transform_0, window_bounds = array<i64: 8, 1>}, {transform_indices = @transform_1, window_bounds = array<i64: 8, 1>}, {transform_indices = @transform_2, window_bounds = array<i64: 8, 256>}, {transform_indices = @transform_3, window_bounds = array<i64: 8, 256>}]} {
    %c0 = arith.constant 0 : index
    %c0_0 = arith.constant 0 : index
    %0 = vector.load %arg4[%c0, %c0_0] : memref<8x256xf32, #tpu.memory_space<vmem>>, vector<8x256xf32>
    %c0_1 = arith.constant 0 : index
    %c0_2 = arith.constant 0 : index
    %1 = vector.load %arg2[%c0_1, %c0_2] : memref<8x1xf32, #tpu.memory_space<vmem>>, vector<8x1xf32>
    %2 = vector.broadcast %1 : vector<8x1xf32> to vector<8x256xf32>
    %3 = arith.mulf %0, %2 : vector<8x256xf32>
    %c0_3 = arith.constant 0 : index
    %c0_4 = arith.constant 0 : index
    %4 = vector.load %arg3[%c0_3, %c0_4] : memref<8x1xf32, #tpu.memory_space<vmem>>, vector<8x1xf32>
    %5 = vector.broadcast %4 : vector<8x1xf32> to vector<8x256xf32>
    %6 = arith.addf %3, %5 : vector<8x256xf32>
    %c0_5 = arith.constant 0 : index
    %c0_6 = arith.constant 0 : index
    %7 = vector.load %arg5[%c0_5, %c0_6] : memref<8x256xf32, #tpu.memory_space<vmem>>, vector<8x256xf32>
    tpu.vector_store %arg5[%c0_5, %c0_6], %6 {strides = array<i32>} : memref<8x256xf32, #tpu.memory_space<vmem>>, vector<8x256xf32>,
    return
  }
  func.func @transform_0(%arg0: i32, %arg1: i32) -> (i32, i32) {
    %c0_i32 = arith.constant 0 : i32
    %c0_i32_0 = arith.constant 0 : i32
    return %arg0, %c0_i32 : i32, i32
  }
  func.func @transform_1(%arg0: i32, %arg1: i32) -> (i32, i32) {
    %c0_i32 = arith.constant 0 : i32
    %c0_i32_0 = arith.constant 0 : i32
    return %arg0, %c0_i32 : i32, i32
  }
  func.func @transform_2(%arg0: i32, %arg1: i32) -> (i32, i32) {
    %c0_i32 = arith.constant 0 : i32
    return %arg0, %arg1 : i32, i32
  }
  func.func @transform_3(%arg0: i32, %arg1: i32) -> (i32, i32) {
    %c0_i32 = arith.constant 0 : i32
    return %arg0, %arg1 : i32, i32
  }
}

</mosaic_0001>

<llo_original>
// kernel: tpu_custom_call.1
$region0: #{tpu_custom_call.1}
  #allocation0 [shape = 'u32[]', space=smem, size = 0x4, offset = 0x4, fixed_abs, tag = 'smem constant byte address 0x4 - core index']
  #allocation1 [shape = 'u32[144,128]{1,0:T(1,128)}', space=vmem, size = 0x12000, scoped, tag = 'internal scratch']
  %s0 = inlined_call_operand.vmem [shape: f32[8,1], index: 0, kind: input, shape index: {}]
  %s1 = inlined_call_operand.vmem [shape: f32[8,1], index: 1, kind: input, shape index: {}]
  %s2 = inlined_call_operand.hbm [shape: f32[8,256], index: 2, kind: input, shape index: {}, may-alias: {2,3}]
  %s3 = inlined_call_operand.hbm [shape: f32[8,256], index: 3, kind: output, shape index: {}, may-alias: {2,3}]
  %s4 = sld [smem:[#allocation0]]
  $region26: #{tpu_custom_call.1} parent=0
    _
  %s6 = ssub.s32 1, %s4
  %s7 = scalar_select 0, %s6, %s4
  $region1: #{tpu_custom_call.1} parent=0
    #allocation2 [shape = 'u8[8192]{0}', space=vmem, size = 0x2000, scoped, tag = 'input window, operand 2, single buffered']
    #allocation3 [shape = 's32[1]{0}', space=sflag, size = 0x4, scoped, tag = 'scoped memory for tpu_custom_call.1']
    #allocation4 [shape = 's32[1]{0}', space=sflag, size = 0x4, scoped, tag = 'scoped memory for tpu_custom_call.1']
    #allocation5 [shape = 'u8[8192]{0}', space=vmem, size = 0x2000, scoped, tag = 'output window, operand 0, single buffered']
    %8 = vsyncpa [#allocation3], 0
    %9 = vsyncpa [#allocation4], 0
    // Predicated region
    $region2: #{tpu_custom_call.1} parent=1 // pred_check
      _
    $region3: #{tpu_custom_call.1} parent=1 // pred_check_branch
      %11 = sbr.rel (0) target = $region5
    $region4: #{tpu_custom_call.1} parent=1 // pred_region
      _
    $region5: #{tpu_custom_call.1} parent=1 // pred_fallthru
      _
    // Predicated region
    $region6: #{tpu_custom_call.1} parent=1 // pred_check
      _
    $region7: #{tpu_custom_call.1} parent=1 // pred_check_branch
      %13 = sbr.rel (0) target = $region9
    $region8: #{tpu_custom_call.1} parent=1 // pred_region
      _
    $region9: #{tpu_custom_call.1} parent=1 // pred_fallthru
      _
    // Predicated region
    $region10: #{tpu_custom_call.1} parent=1 // pred_check
      _
    $region11: #{tpu_custom_call.1} parent=1 // pred_check_branch
      %15 = sbr.rel (0) target = $region13
    $region12: #{tpu_custom_call.1} parent=1 // pred_region
      %s17 = ssub.s32 256, 256
      %18 = vsyncadd [#allocation3], %s17
      %s20 = sshll.u32 [#allocation2], 4
      %s21 = int_to_ptr.vmem [resolvable:$true] %s20
      %23 = dma.hbm_to_vmem [thread:$0]  %s2, 256, %s21, [#allocation3]
    $region13: #{tpu_custom_call.1} parent=1 // pred_fallthru
      _
    // Predicated region
    $region14: #{tpu_custom_call.1} parent=1 // pred_check
      _
    $region15: #{tpu_custom_call.1} parent=1 // pred_check_branch
      %25 = sbr.rel (0) target = $region17
    $region16: #{tpu_custom_call.1} parent=1 // pred_region
      %26 = dma.done [#allocation3], 256
    $region17: #{tpu_custom_call.1} parent=1 // pred_fallthru
      _
    %v27 = vld [vmem:[#allocation2] sm:$0xff]
    %v28 = vld [vmem:[#allocation2 + $0x8] sm:$0xff]
    %v29 = vld [vmem:[%s0] sm:$0xff]
    %31 = vset.pattern.permute.xlu0 0
    %32 = vperm.xlu0 %31, %v29
    %v33 = vpop.permute.xlu0 %32
    %v35 = vmul.f32 %v27, %v33
    %v36 = vmul.f32 %v28, %v33
    %v37 = vld [vmem:[%s1] sm:$0xff]
    %39 = vset.pattern.permute.xlu0 0
    %40 = vperm.xlu0 %39, %v37
    %v41 = vpop.permute.xlu0 %40
    %v43 = vadd.f32 %v35, %v41
    %v44 = vadd.f32 %v36, %v41
    %45 = vst [vmem:[#allocation5] sm:$0xff] %v43
    %46 = vst [vmem:[#allocation5 + $0x8] sm:$0xff] %v44
    // Predicated region
    $region18: #{tpu_custom_call.1} parent=1 // pred_check
      _
    $region19: #{tpu_custom_call.1} parent=1 // pred_check_branch
      %48 = sbr.rel (0) target = $region21
    $region20: #{tpu_custom_call.1} parent=1 // pred_region
      %s50 = ssub.s32 256, 256
      %51 = vsyncadd [#allocation4], %s50
      %s53 = sshll.u32 [#allocation5], 4
      %s54 = int_to_ptr.vmem [resolvable:$true] %s53
      %56 = dma.vmem_to_hbm [thread:$0]  %s54, 256, %s3, [#allocation4]
    $region21: #{tpu_custom_call.1} parent=1 // pred_fallthru
      _
    // Predicated region
    $region22: #{tpu_custom_call.1} parent=1 // pred_check
      _
    $region23: #{tpu_custom_call.1} parent=1 // pred_check_branch
      %58 = sbr.rel (0) target = $region25
    $region24: #{tpu_custom_call.1} parent=1 // pred_region
      %59 = dma.done [#allocation4], 256
    $region25: #{tpu_custom_call.1} parent=1 // pred_fallthru
      _
    %60 = vsyncpa [#allocation3], 1
    %61 = vsyncpa [#allocation4], 1

</llo_original>
